<compile_context>
chip_gen: v7x
topology: tpu7x:2x2x1
jax: 0.10.0
libtpu: 0.0.40
codegen_flags: <defaults>
</compile_context>

<pallas_src>
import jax
import jax.numpy as jnp
from jax.experimental import pallas as pl
from jax.experimental.pallas import tpu as pltpu


def _round_up(n, m):
    return (n + m - 1) // m * m


def _cdiv(a, b):
    return -(-a // b)


def _linear_kernel(x_ref, w_ref, b_ref, o_ref):
    # x_ref: (TB, TK) bf16   w_ref: (TK, OutPad) bf16
    # b_ref: (1, OutPad) f32 o_ref: (TB, OutPad) f32  (resident across the K axis)
    k = pl.program_id(1)
    acc = jnp.dot(x_ref[...], w_ref[...], preferred_element_type=jnp.float32)

    @pl.when(k == 0)
    def _():
        o_ref[...] = acc + b_ref[...]   # fuse bias into the first partial sum (no zero fill)

    @pl.when(k > 0)
    def _():
        o_ref[...] += acc


def make_linear_regression(weight, bias, *, compute_dtype=jnp.bfloat16,
                           vmem_tile_budget=8 << 20, k_tile_threshold=4096):
    """One-time parameter prep; returns a jitted forward(x) = x @ weight.T + bias.

    weight: [Out, In] (PyTorch nn.Linear convention), bias: [Out].
    """
    Out, In = weight.shape
    assert bias.shape == (Out,)
    cbytes = jnp.dtype(compute_dtype).itemsize

    # Lane-dense output padding; use 256-multiples once Out is large (v6e/v7x 256x256 MXU),
    # otherwise 128 (v5e-optimal, keeps writeback inflation minimal for tiny Out).
    out_pad = _round_up(Out, 256) if Out > 128 else _round_up(Out, 128)

    # Contraction tiling: full-width K for moderate In; for large In, a 256-multiple tile
    # that divides In, accumulated over a trailing "arbitrary" grid axis.
    tk = In
    if In > k_tile_threshold:
        for cand in (2048, 1024, 512, 256):
            if In % cand == 0:
                tk = cand
                break
        # TODO(synk): zero-pad the K dimension (x and w) once to support ragged K tiles
        # when no 256-multiple divides In.
    nk = In // tk

    # One-time MXU-canonical RHS layout [In, OutPad] (zero padded) + f32 bias row.
    w_t = (jnp.zeros((In, out_pad), dtype=compute_dtype)
           .at[:, :Out].set(weight.T.astype(compute_dtype)))
    b2d = (jnp.zeros((1, out_pad), dtype=jnp.float32)
           .at[:, :Out].set(bias.astype(jnp.float32)))

    def forward(x):
        B = x.shape[0]
        assert x.shape == (B, In), "input feature-dim mismatch"
        x = x.astype(compute_dtype)  # ideally upstream already produces bf16 activations

        # Batch tile sized by per-step VMEM bytes: double-buffered x + double-buffered f32 out.
        per_row = 2 * tk * cbytes + 2 * out_pad * 4
        tb = max(16, (vmem_tile_budget // per_row) // 16 * 16)
        tb = min(tb, 8192)
        if tb >= B:
            tb = B                      # single full-extent batch block (always legal)
        nb = _cdiv(B, tb)
        # v7x: guarantee >=2 batch steps once there is enough work, so both TCs are used.
        if nb == 1 and B >= 2048:
            tb = _round_up(_cdiv(B, 2), 16)
            nb = _cdiv(B, tb)

        # Explicit scoped-VMEM limit from the actual footprint (+50% headroom).
        resident_w = (1 if nk == 1 else 2) * tk * out_pad * cbytes
        vmem_need = (2 * tb * tk * cbytes + 2 * tb * out_pad * 4
                     + resident_w + 2 * out_pad * 4)
        vmem_limit = int(min(64 << 20, max(16 << 20, int(vmem_need * 1.5) + (2 << 20))))

        # Grid-constant weight/bias: single-buffer them to halve resident VMEM.
        w_mode = pl.Buffered(1) if nk == 1 else None

        out = pl.pallas_call(
            _linear_kernel,
            out_shape=jax.ShapeDtypeStruct((B, out_pad), jnp.float32),
            grid_spec=pl.GridSpec(
                grid=(nb, nk),
                in_specs=[
                    pl.BlockSpec((tb, tk), lambda i, k: (i, k)),
                    pl.BlockSpec((tk, out_pad), lambda i, k: (k, 0), pipeline_mode=w_mode),
                    pl.BlockSpec((1, out_pad), lambda i, k: (0, 0),
                                 pipeline_mode=pl.Buffered(1)),
                ],
                out_specs=pl.BlockSpec((tb, out_pad), lambda i, k: (i, 0)),
            ),
            compiler_params=pltpu.CompilerParams(
                dimension_semantics=("parallel", "arbitrary"),
                vmem_limit_bytes=vmem_limit,
            ),
            cost_estimate=pl.CostEstimate(
                flops=2 * B * In * out_pad,
                transcendentals=0,
                bytes_accessed=(B * In * cbytes + In * out_pad * cbytes
                                + out_pad * 4 + B * out_pad * 4),
            ),
        )(x, w_t, b2d)

        # Strip lane padding back to the module's output width.
        return out[:, :Out]

    return jax.jit(forward)


if __name__ == "__main__":
    # Small shapes consistent with nn.Linear(input_size, output_size)
    batch = 8
    input_size = 32
    output_size = 16

    key = jax.random.PRNGKey(0)
    kx, kw, kb = jax.random.split(key, 3)

    # Deterministic parameter init (mimics PyTorch uniform(-1/sqrt(in), 1/sqrt(in)))
    bound = 1.0 / (input_size ** 0.5)
    x = jax.random.normal(kx, (batch, input_size), dtype=jnp.float32)
    weight = jax.random.uniform(kw, (output_size, input_size),
                                minval=-bound, maxval=bound, dtype=jnp.float32)
    bias = jax.random.uniform(kb, (output_size,),
                              minval=-bound, maxval=bound, dtype=jnp.float32)

    forward = make_linear_regression(weight, bias)
    y = jax.block_until_ready(forward(x))
    assert y.shape == (batch, output_size)

    # Tight check against the same bf16-input / f32-accumulate computation.
    y_ref_bf = (x.astype(jnp.bfloat16).astype(jnp.float32)
                @ weight.T.astype(jnp.bfloat16).astype(jnp.float32)) + bias
    assert jnp.allclose(y, y_ref_bf, atol=1e-3, rtol=1e-3)

    # Sanity against the full-precision PyTorch-equivalent reference.
    y_ref_f32 = x @ weight.T + bias
    assert jnp.allclose(y, y_ref_f32, atol=5e-2, rtol=5e-2)

    print("KERNEL_OK")
</pallas_src>

<mosaic_0001>
module attributes {stable_mosaic.version = 11 : i64} {
  func.func @_linear_kernel(%arg0: i32, %arg1: i32, %arg2: memref<8x32xbf16, #tpu.memory_space<vmem>>, %arg3: memref<32x128xbf16, #tpu.memory_space<vmem>>, %arg4: memref<1x128xf32, #tpu.memory_space<vmem>>, %arg5: memref<8x128xf32, #tpu.memory_space<vmem>>) attributes {dimension_semantics = [#tpu.dimension_semantics<parallel>, #tpu.dimension_semantics<arbitrary>], iteration_bounds = array<i64: 1, 1>, scalar_prefetch = 0 : i64, scratch_operands = 0 : i64, tpu.core_type = #tpu.core_type<tc>, window_params = [{transform_indices = @transform_0, window_bounds = array<i64: 8, 32>}, {pipeline_mode = #tpu.pipeline_mode<synchronous>, transform_indices = @transform_1, window_bounds = array<i64: 32, 128>}, {pipeline_mode = #tpu.pipeline_mode<synchronous>, transform_indices = @transform_2, window_bounds = array<i64: 1, 128>}, {transform_indices = @transform_3, window_bounds = array<i64: 8, 128>}]} {
    %c0 = arith.constant 0 : index
    %c0_0 = arith.constant 0 : index
    %0 = vector.load %arg2[%c0, %c0_0] : memref<8x32xbf16, #tpu.memory_space<vmem>>, vector<8x32xbf16>
    %c0_1 = arith.constant 0 : index
    %c0_2 = arith.constant 0 : index
    %1 = vector.load %arg3[%c0_1, %c0_2] : memref<32x128xbf16, #tpu.memory_space<vmem>>, vector<32x128xbf16>
    %cst = arith.constant dense<0.000000e+00> : vector<8x128xf32>
    %2 = tpu.matmul %0, %1, %cst {dimension_numbers = #tpu.dot_dimension_numbers<[1], [0], [0], [1], [0, 0, 1, 1], [], []>} : vector<8x32xbf16>, vector<32x128xbf16>, vector<8x128xf32> -> vector<8x128xf32>
    %c0_i32 = arith.constant 0 : i32
    %3 = arith.cmpi eq, %arg1, %c0_i32 : i32
    %4 = arith.extui %3 : i1 to i32
    %c0_i32_3 = arith.constant 0 : i32
    %5 = arith.cmpi ne, %4, %c0_i32_3 : i32
    scf.if %5 {
      %c0_6 = arith.constant 0 : index
      %c0_7 = arith.constant 0 : index
      %9 = vector.load %arg4[%c0_6, %c0_7] : memref<1x128xf32, #tpu.memory_space<vmem>>, vector<1x128xf32>
      %10 = vector.broadcast %9 : vector<1x128xf32> to vector<8x128xf32>
      %11 = arith.addf %2, %10 : vector<8x128xf32>
      %c0_8 = arith.constant 0 : index
      %c0_9 = arith.constant 0 : index
      %12 = vector.load %arg5[%c0_8, %c0_9] : memref<8x128xf32, #tpu.memory_space<vmem>>, vector<8x128xf32>
      tpu.vector_store %arg5[%c0_8, %c0_9], %11 {strides = array<i32>} : memref<8x128xf32, #tpu.memory_space<vmem>>, vector<8x128xf32>,
    } else {
    }
    %c0_i32_4 = arith.constant 0 : i32
    %6 = arith.cmpi sgt, %arg1, %c0_i32_4 : i32
    %7 = arith.extui %6 : i1 to i32
    %c0_i32_5 = arith.constant 0 : i32
    %8 = arith.cmpi ne, %7, %c0_i32_5 : i32
    scf.if %8 {
      %c0_6 = arith.constant 0 : index
      %c0_7 = arith.constant 0 : index
      %9 = vector.load %arg5[%c0_6, %c0_7] : memref<8x128xf32, #tpu.memory_space<vmem>>, vector<8x128xf32>
      %10 = arith.addf %9, %2 : vector<8x128xf32>
      %c0_8 = arith.constant 0 : index
      %c0_9 = arith.constant 0 : index
      %11 = vector.load %arg5[%c0_8, %c0_9] : memref<8x128xf32, #tpu.memory_space<vmem>>, vector<8x128xf32>
      tpu.vector_store %arg5[%c0_8, %c0_9], %10 {strides = array<i32>} : memref<8x128xf32, #tpu.memory_space<vmem>>, vector<8x128xf32>,
    } else {
    }
    return
  }
  func.func @transform_0(%arg0: i32, %arg1: i32) -> (i32, i32) {
    %c0_i32 = arith.constant 0 : i32
    return %arg0, %arg1 : i32, i32
  }
  func.func @transform_1(%arg0: i32, %arg1: i32) -> (i32, i32) {
    %c0_i32 = arith.constant 0 : i32
    %c0_i32_0 = arith.constant 0 : i32
    return %arg1, %c0_i32 : i32, i32
  }
  func.func @transform_2(%arg0: i32, %arg1: i32) -> (i32, i32) {
    %c0_i32 = arith.constant 0 : i32
    %c0_i32_0 = arith.constant 0 : i32
    %c0_i32_1 = arith.constant 0 : i32
    return %c0_i32, %c0_i32_0 : i32, i32
  }
  func.func @transform_3(%arg0: i32, %arg1: i32) -> (i32, i32) {
    %c0_i32 = arith.constant 0 : i32
    %c0_i32_0 = arith.constant 0 : i32
    return %arg0, %c0_i32 : i32, i32
  }
}

</mosaic_0001>

<llo_original>
// kernel: forward.1
$region0: #{forward.1}
  #allocation0 [shape = 'u32[]', space=smem, size = 0x4, offset = 0x4, fixed_abs, tag = 'smem constant byte address 0x4 - core index']
  #allocation1 [shape = 'u32[144,128]{1,0:T(1,128)}', space=vmem, size = 0x12000, scoped, tag = 'internal scratch']
  %s0 = inlined_call_operand.vmem [shape: bf16[8,32], index: 0, kind: input, shape index: {}]
  %s1 = inlined_call_operand.vmem [shape: bf16[32,128], index: 1, kind: input, shape index: {}]
  %s2 = inlined_call_operand.vmem [shape: f32[1,128], index: 2, kind: input, shape index: {}]
  %s3 = inlined_call_operand.hbm [shape: f32[8,128], index: 3, kind: output, shape index: {}]
  %s4 = sld [smem:[#allocation0]]
  $region30: #{forward.1} parent=0
    _
  %s6 = ssub.s32 1, %s4
  %s7 = scalar_select 0, %s6, %s4
  $region1: #{forward.1} parent=0
    #allocation2 [shape = 'u8[4096]{0}', space=vmem, size = 0x1000, scoped, tag = 'output window, operand 0, single buffered']
    #allocation3 [shape = 's32[1]{0}', space=sflag, size = 0x4, scoped, tag = 'scoped memory for forward.1']
    %8 = vsyncpa [#allocation3], 0
    // Predicated region
    $region2: #{forward.1} parent=1 // pred_check
      _
    $region3: #{forward.1} parent=1 // pred_check_branch
      %10 = sbr.rel (0) target = $region5
    $region4: #{forward.1} parent=1 // pred_region
      _
    $region5: #{forward.1} parent=1 // pred_fallthru
      _
    // Predicated region
    $region6: #{forward.1} parent=1 // pred_check
      _
    $region7: #{forward.1} parent=1 // pred_check_branch
      %12 = sbr.rel (0) target = $region9
    $region8: #{forward.1} parent=1 // pred_region
      _
    $region9: #{forward.1} parent=1 // pred_fallthru
      _
    // Predicated region
    $region10: #{forward.1} parent=1 // pred_check
      _
    $region11: #{forward.1} parent=1 // pred_check_branch
      %14 = sbr.rel (0) target = $region13
    $region12: #{forward.1} parent=1 // pred_region
      _
    $region13: #{forward.1} parent=1 // pred_fallthru
      _
    %v16 = vld [vmem:[%s0] sm:$0xf]
    %v17 = vld [vmem:[%s1] sm:$0xf]
    %v18 = vld [vmem:[%s1 + $0x4] sm:$0xf]
    %v19 = vld [vmem:[%s1 + $0x8] sm:$0xf]
    %v20 = vld [vmem:[%s1 + $0xc] sm:$0xf]
    %v25 = vunpack.c.l.b16 %v17
    %v26 = vunpack.c.l.b16 %v18
    %v27 = vunpack.c.l.b16 %v19
    %v28 = vunpack.c.l.b16 %v20
    %v29 = vpack.c.b16 %v26, %v25
    %v30 = vpack.c.b16 %v28, %v27
    %vm33 = vcmask 261120
    %v35 = vsel %vm33, %v16, 0
    %37 = vmatprep.subr.bf16.mxu0 0
    %38 = vmatpush1.bf16.msra.mxu0 %v29
    %39 = vmatprep.subr.bf16.mxu0 0
    %40 = vmatpush1.bf16.msra.mxu0 %v30
    %41 = vmatprep.subr.bf16.mxu0 0
    %42 = vmatpush1.bf16.msra.mxu0 0
    %43 = vmatprep.subr.bf16.mxu0 0
    %44 = vmatpush1.bf16.msra.mxu0 0
    %45 = vmatprep.subr.bf16.mxu0 0
    %46 = vmatpush1.bf16.msra.mxu0 0
    %47 = vmatprep.subr.bf16.mxu0 0
    %48 = vmatpush1.bf16.msra.mxu0 0
    %49 = vmatprep.subr.bf16.mxu0 0
    %50 = vmatpush1.bf16.msra.mxu0 0
    %51 = vmatprep.subr.bf16.mxu0 0
    %52 = vmatpush1.bf16.msra.mxu0 0
    %53 = vmatprep.subr.bf16.mxu0 0
    %54 = vmatpush1.bf16.msra.mxu0 0
    %55 = vmatprep.subr.bf16.mxu0 0
    %56 = vmatpush1.bf16.msra.mxu0 0
    %57 = vmatprep.subr.bf16.mxu0 0
    %58 = vmatpush1.bf16.msra.mxu0 0
    %59 = vmatprep.subr.bf16.mxu0 0
    %60 = vmatpush1.bf16.msra.mxu0 0
    %61 = vmatprep.subr.bf16.mxu0 0
    %62 = vmatpush1.bf16.msra.mxu0 0
    %63 = vmatprep.subr.bf16.mxu0 0
    %64 = vmatpush1.bf16.msra.mxu0 0
    %65 = vmatprep.subr.bf16.mxu0 0
    %66 = vmatpush1.bf16.msra.mxu0 0
    %67 = vmatprep.subr.bf16.mxu0 0
    %68 = vmatpush1.bf16.msra.mxu0 0
    %69 = vmatprep.mubr.bf16.mxu0 0
    %70 = vmatmul.mubr.bf16.gmra.mrb[0].mxu0 %v35
    %v71 = vpop.f32.mrb[0].mxu0
    %v72 = vadd.f32 0.0, %v71
    %v73 = vpop.f32.mrb[0].mxu0
    %v74 = vpop.f32.mrb[0].mxu0
    %v75 = vpop.f32.mrb[0].mxu0
    %76 = vdwg.mxu0
    %p77 = scmp.eq.s32.totalorder 0, 0
    // Predicated region
    $region14: #{forward.1} parent=1 // pred_check
      %p78 = pneg %p77
    $region15: #{forward.1} parent=1 // pred_check_branch
      %80 = sbr.rel (%p78) target = $region17
    $region16: #{forward.1} parent=1 // pred_region
      %v81 = vld [vmem:[%s2] sm:$0x1]
      %v83 = vlaneseq
      %v84 = vshrl.u32 %v83, 7
      %v85 = vsub.s32 0, %v84
      %v86 = vrot.slane %v81, %v85
      %v88 = vadd.f32 %v72, %v86
      %89 = vst [vmem:[#allocation2] sm:$0xff] %v88
    $region17: #{forward.1} parent=1 // pred_fallthru
      _
    %p90 = scmp.gt.s32.totalorder 0, 0
    // Predicated region
    $region18: #{forward.1} parent=1 // pred_check
      %p91 = pneg %p90
    $region19: #{forward.1} parent=1 // pred_check_branch
      %93 = sbr.rel (%p91) target = $region21
    $region20: #{forward.1} parent=1 // pred_region
      %v94 = vld [vmem:[#allocation2] sm:$0xff]
      %v95 = vadd.f32 %v94, %v72
      %96 = vst [vmem:[#allocation2] sm:$0xff] %v95
    $region21: #{forward.1} parent=1 // pred_fallthru
      _
    // Predicated region
    $region22: #{forward.1} parent=1 // pred_check
      _
    $region23: #{forward.1} parent=1 // pred_check_branch
      %98 = sbr.rel (0) target = $region25
    $region24: #{forward.1} parent=1 // pred_region
      %s100 = ssub.s32 128, 128
      %101 = vsyncadd [#allocation3], %s100
      %s103 = sshll.u32 [#allocation2], 4
      %s104 = int_to_ptr.vmem [resolvable:$true] %s103
      %106 = dma.vmem_to_hbm [thread:$0]  %s104, 128, %s3, [#allocation3]
    $region25: #{forward.1} parent=1 // pred_fallthru
      _
    // Predicated region
    $region26: #{forward.1} parent=1 // pred_check
      _
    $region27: #{forward.1} parent=1 // pred_check_branch
      %108 = sbr.rel (0) target = $region29
    $region28: #{forward.1} parent=1 // pred_region
      %109 = dma.done [#allocation3], 128
    $region29: #{forward.1} parent=1 // pred_fallthru
      _
    %110 = vsyncpa [#allocation3], 1

</llo_original>
